<compile_context>
chip_gen: v5e
topology: v5e:2x2
jax: 0.10.0
libtpu: 0.0.40
codegen_flags: <defaults>
</compile_context>

<pallas_src>
import jax
import jax.numpy as jnp
from jax.experimental import pallas as pl
from jax.experimental.pallas import tpu as pltpu

_VMEM_LIMIT_BYTES = 32 * 1024 * 1024        # raises v5e's 16 MiB scoped default; = v6e/v7x default
_ACT_VMEM_BUDGET = _VMEM_LIMIT_BYTES // 2   # budget for double-buffered activation blocks per step


def _skip_branch_kernel(xa_ref, xb_ref, w1_ref, w2_ref, b1_ref, b2_ref, out_ref):
    # xa_ref/xb_ref: (NB, Cin, TILE_P)  strided-parity activation tiles, pixels on the lane axis
    # w1_ref/w2_ref: (Ch, Cin)          BN-scale-folded 1x1 conv weights (Ch = Cout // 2)
    # b1_ref/b2_ref: (Ch, 1)            BN folded bias halves
    # out_ref:       (NB, Cout, TILE_P)
    ch = w1_ref.shape[0]
    for b in range(xa_ref.shape[0]):        # static; NB == 1 except on the small-PW path
        xa = jnp.maximum(xa_ref[b], 0.0)    # skip-branch ReLU (branch1)
        xb = jnp.maximum(xb_ref[b], 0.0)    # skip-branch ReLU (branch2)
        y1 = jnp.dot(w1_ref[...], xa, preferred_element_type=jnp.float32) + b1_ref[...]
        y2 = jnp.dot(w2_ref[...], xb, preferred_element_type=jnp.float32) + b2_ref[...]
        out_ref[b, 0:ch, :] = y1.astype(out_ref.dtype)   # each half stored directly (no concat)
        out_ref[b, ch:, :] = y2.astype(out_ref.dtype)


def _pick_tiles(n, pw, cin, cout):
    """Return (NB, TILE_P): batch rows per block and pixel-tile size.

    Per-step double-buffered f32 working set = 2 * 4B * TILE_P * (2*Cin + Cout) bytes
    (two input blocks + one output block).  TILE_P is kept a multiple of 128 (lane-dense
    stores) and capped by the VMEM budget; when PW < 128 the whole batch goes into a single
    block to avoid many tiny masked-store grid steps.
    """
    bytes_per_pixel = 8 * (2 * cin + cout)
    if pw < 128:
        nb = n if n * pw * bytes_per_pixel <= _ACT_VMEM_BUDGET else 1
        return nb, pw
    tile = min(pw, 4096, _ACT_VMEM_BUDGET // bytes_per_pixel)
    tile = max(128, (tile // 128) * 128)
    return 1, tile


def skip_branch_forward(x, w1, w2, gamma, beta, running_mean, running_var, eps=1e-5):
    """x: NCHW float32 [N, Cin, H, W]; w1,w2: [Cout//2, Cin, 1, 1] conv weights (no bias)."""
    N, Cin, H, W = x.shape
    assert H % 2 == 0 and W % 2 == 0, (
        "stride-2 skip path requires even H and W (the PyTorch concat would fail otherwise)")
    Ch = w1.shape[0]                     # Cout // 2
    Cout = 2 * Ch
    H2, W2 = H // 2, W // 2
    PW = H2 * W2

    NB, TILE_P = _pick_tiles(N, PW, Cin, Cout)
    n_tiles = pl.cdiv(PW, TILE_P)        # ragged last tile handled by Pallas block padding

    # Strided-parity views kept in channels x pixels order (lane-dense, no NHWC transposes;
    # the [N,Cin,H2,W2]->[N,Cin,PW] reshape is free).  allow_input_fusion below lets XLA fold
    # these slice+reshape producers into the pallas input DMA instead of materializing them.
    xa = x[:, :, ::2, ::2].reshape(N, Cin, PW)
    xb = x[:, :, 1::2, 1::2].reshape(N, Cin, PW)

    # Fold eval-mode BatchNorm2d into per-output-channel scale/bias; fold the scale into the
    # conv weights (matmul is linear) so the kernel epilogue is just a bias add per half.
    scale = gamma / jnp.sqrt(running_var + eps)            # [Cout]
    shift = beta - running_mean * scale                    # [Cout]
    w1m = w1[:, :, 0, 0] * scale[:Ch, None]                # [Ch, Cin]
    w2m = w2[:, :, 0, 0] * scale[Ch:, None]                # [Ch, Cin]
    b1 = shift[:Ch].reshape(Ch, 1)                         # [Ch, 1]
    b2 = shift[Ch:].reshape(Ch, 1)                         # [Ch, 1]

    flops = 2 * N * PW * Cin * Cout
    bytes_accessed = 4 * (2 * N * PW * Cin + N * PW * Cout + 2 * Ch * Cin + 2 * Ch)

    out_flat = pl.pallas_call(
        _skip_branch_kernel,
        out_shape=jax.ShapeDtypeStruct((N, Cout, PW), jnp.float32),
        grid=(N // NB, n_tiles),
        in_specs=[
            pl.BlockSpec((NB, Cin, TILE_P), lambda n, t: (n, 0, t)),
            pl.BlockSpec((NB, Cin, TILE_P), lambda n, t: (n, 0, t)),
            pl.BlockSpec((Ch, Cin), lambda n, t: (0, 0)),
            pl.BlockSpec((Ch, Cin), lambda n, t: (0, 0)),
            pl.BlockSpec((Ch, 1), lambda n, t: (0, 0)),
            pl.BlockSpec((Ch, 1), lambda n, t: (0, 0)),
        ],
        out_specs=pl.BlockSpec((NB, Cout, TILE_P), lambda n, t: (n, 0, t)),
        compiler_params=pltpu.CompilerParams(
            dimension_semantics=("parallel", "parallel"),
            vmem_limit_bytes=_VMEM_LIMIT_BYTES,
            allow_input_fusion=[True, True, False, False, False, False],
        ),
        cost_estimate=pl.CostEstimate(
            flops=flops, transcendentals=0, bytes_accessed=bytes_accessed),
    )(xa, xb, w1m, w2m, b1, b2)

    # [N, Cout, PW] -> NCHW (free reshape, no transpose needed).
    return out_flat.reshape(N, Cout, H2, W2)


def _reference(x, w1, w2, gamma, beta, running_mean, running_var, eps=1e-5):
    """Pure-JAX reference mirroring the PyTorch skip path (eval-mode BN)."""
    def conv1x1(xi, w):
        return jnp.einsum('nchw,oc->nohw', xi, w[:, :, 0, 0])

    a = conv1x1(jax.nn.relu(x[:, :, ::2, ::2]), w1)
    b = conv1x1(jax.nn.relu(x[:, :, 1::2, 1::2]), w2)
    y = jnp.concatenate([a, b], axis=1)
    s = gamma / jnp.sqrt(running_var + eps)
    sh = beta - running_mean * s
    return y * s[None, :, None, None] + sh[None, :, None, None]


if __name__ == "__main__":
    # Two small configs: PW < 128 (whole-batch block path) and PW >= 128 (tiled path).
    for (N, Cin, H, W, Cout) in [(2, 8, 16, 16, 16), (2, 8, 32, 32, 16)]:
        Ch = Cout // 2
        key = jax.random.PRNGKey(0)
        kx, k1, k2, kg, kb, km, kv = jax.random.split(key, 7)

        x = jax.random.normal(kx, (N, Cin, H, W), dtype=jnp.float32)
        w1 = jax.random.normal(k1, (Ch, Cin, 1, 1), dtype=jnp.float32) * 0.1
        w2 = jax.random.normal(k2, (Ch, Cin, 1, 1), dtype=jnp.float32) * 0.1
        gamma = jax.random.normal(kg, (Cout,), dtype=jnp.float32) * 0.1 + 1.0
        beta = jax.random.normal(kb, (Cout,), dtype=jnp.float32) * 0.1
        running_mean = jax.random.normal(km, (Cout,), dtype=jnp.float32) * 0.1
        running_var = jnp.abs(jax.random.normal(kv, (Cout,), dtype=jnp.float32)) * 0.1 + 1.0

        out = skip_branch_forward(x, w1, w2, gamma, beta, running_mean, running_var)
        out = jax.block_until_ready(out)

        ref = _reference(x, w1, w2, gamma, beta, running_mean, running_var)
        assert out.shape == (N, Cout, H // 2, W // 2)
        assert jnp.allclose(out, ref, atol=1e-4, rtol=1e-4), \
            f"mismatch vs reference for input shape {(N, Cin, H, W)}"

    print("KERNEL_OK")
</pallas_src>

<mosaic_0001>
module attributes {stable_mosaic.version = 11 : i64} {
  func.func @_skip_branch_kernel(%arg0: i32, %arg1: i32, %arg2: memref<2x8x64xf32, #tpu.memory_space<vmem>>, %arg3: memref<2x8x64xf32, #tpu.memory_space<vmem>>, %arg4: memref<8x8xf32, #tpu.memory_space<vmem>>, %arg5: memref<8x8xf32, #tpu.memory_space<vmem>>, %arg6: memref<8x1xf32, #tpu.memory_space<vmem>>, %arg7: memref<8x1xf32, #tpu.memory_space<vmem>>, %arg8: memref<2x16x64xf32, #tpu.memory_space<vmem>>) attributes {dimension_semantics = [#tpu.dimension_semantics<parallel>, #tpu.dimension_semantics<parallel>], iteration_bounds = array<i64: 1, 1>, scalar_prefetch = 0 : i64, scratch_operands = 0 : i64, tpu.core_type = #tpu.core_type<tc>, window_params = [{transform_indices = @transform_0, window_bounds = array<i64: 2, 8, 64>}, {transform_indices = @transform_1, window_bounds = array<i64: 2, 8, 64>}, {pipeline_mode = #tpu.pipeline_mode<synchronous>, transform_indices = @transform_2, window_bounds = array<i64: 8, 8>}, {pipeline_mode = #tpu.pipeline_mode<synchronous>, transform_indices = @transform_3, window_bounds = array<i64: 8, 8>}, {pipeline_mode = #tpu.pipeline_mode<synchronous>, transform_indices = @transform_4, window_bounds = array<i64: 8, 1>}, {pipeline_mode = #tpu.pipeline_mode<synchronous>, transform_indices = @transform_5, window_bounds = array<i64: 8, 1>}, {transform_indices = @transform_6, window_bounds = array<i64: 2, 16, 64>}]} {
    %c0 = arith.constant 0 : index
    %c0_0 = arith.constant 0 : index
    %c0_1 = arith.constant 0 : index
    %0 = vector.load %arg2[%c0, %c0_0, %c0_1] : memref<2x8x64xf32, #tpu.memory_space<vmem>>, vector<1x8x64xf32>
    %1 = vector.shape_cast %0 : vector<1x8x64xf32> to vector<8x64xf32>
    %cst = arith.constant 0.000000e+00 : f32
    %2 = vector.broadcast %cst : f32 to vector<8x64xf32>
    %3 = arith.maximumf %1, %2 : vector<8x64xf32>
    %c0_2 = arith.constant 0 : index
    %c0_3 = arith.constant 0 : index
    %c0_4 = arith.constant 0 : index
    %4 = vector.load %arg3[%c0_2, %c0_3, %c0_4] : memref<2x8x64xf32, #tpu.memory_space<vmem>>, vector<1x8x64xf32>
    %5 = vector.shape_cast %4 : vector<1x8x64xf32> to vector<8x64xf32>
    %cst_5 = arith.constant 0.000000e+00 : f32
    %6 = vector.broadcast %cst_5 : f32 to vector<8x64xf32>
    %7 = arith.maximumf %5, %6 : vector<8x64xf32>
    %c0_6 = arith.constant 0 : index
    %c0_7 = arith.constant 0 : index
    %8 = vector.load %arg4[%c0_6, %c0_7] : memref<8x8xf32, #tpu.memory_space<vmem>>, vector<8x8xf32>
    %cst_8 = arith.constant dense<0.000000e+00> : vector<8x64xf32>
    %9 = tpu.matmul %8, %3, %cst_8 {dimension_numbers = #tpu.dot_dimension_numbers<[1], [0], [0], [1], [0, 0, 1, 1], [], []>} : vector<8x8xf32>, vector<8x64xf32>, vector<8x64xf32> -> vector<8x64xf32>
    %c0_9 = arith.constant 0 : index
    %c0_10 = arith.constant 0 : index
    %10 = vector.load %arg6[%c0_9, %c0_10] : memref<8x1xf32, #tpu.memory_space<vmem>>, vector<8x1xf32>
    %11 = vector.broadcast %10 : vector<8x1xf32> to vector<8x64xf32>
    %12 = arith.addf %9, %11 : vector<8x64xf32>
    %c0_11 = arith.constant 0 : index
    %c0_12 = arith.constant 0 : index
    %13 = vector.load %arg5[%c0_11, %c0_12] : memref<8x8xf32, #tpu.memory_space<vmem>>, vector<8x8xf32>
    %cst_13 = arith.constant dense<0.000000e+00> : vector<8x64xf32>
    %14 = tpu.matmul %13, %7, %cst_13 {dimension_numbers = #tpu.dot_dimension_numbers<[1], [0], [0], [1], [0, 0, 1, 1], [], []>} : vector<8x8xf32>, vector<8x64xf32>, vector<8x64xf32> -> vector<8x64xf32>
    %c0_14 = arith.constant 0 : index
    %c0_15 = arith.constant 0 : index
    %15 = vector.load %arg7[%c0_14, %c0_15] : memref<8x1xf32, #tpu.memory_space<vmem>>, vector<8x1xf32>
    %16 = vector.broadcast %15 : vector<8x1xf32> to vector<8x64xf32>
    %17 = arith.addf %14, %16 : vector<8x64xf32>
    %c0_16 = arith.constant 0 : index
    %c0_17 = arith.constant 0 : index
    %c0_18 = arith.constant 0 : index
    %18 = vector.load %arg8[%c0_16, %c0_17, %c0_18] : memref<2x16x64xf32, #tpu.memory_space<vmem>>, vector<1x8x64xf32>
    %19 = vector.shape_cast %18 : vector<1x8x64xf32> to vector<8x64xf32>
    %20 = vector.shape_cast %12 : vector<8x64xf32> to vector<1x8x64xf32>
    tpu.vector_store %arg8[%c0_16, %c0_17, %c0_18], %20 {strides = array<i32>} : memref<2x16x64xf32, #tpu.memory_space<vmem>>, vector<1x8x64xf32>,
    %c0_19 = arith.constant 0 : index
    %c8 = arith.constant 8 : index
    %c0_20 = arith.constant 0 : index
    %21 = vector.load %arg8[%c0_19, %c8, %c0_20] : memref<2x16x64xf32, #tpu.memory_space<vmem>>, vector<1x8x64xf32>
    %22 = vector.shape_cast %21 : vector<1x8x64xf32> to vector<8x64xf32>
    %23 = vector.shape_cast %17 : vector<8x64xf32> to vector<1x8x64xf32>
    tpu.vector_store %arg8[%c0_19, %c8, %c0_20], %23 {strides = array<i32>} : memref<2x16x64xf32, #tpu.memory_space<vmem>>, vector<1x8x64xf32>,
    %c1 = arith.constant 1 : index
    %c0_21 = arith.constant 0 : index
    %c0_22 = arith.constant 0 : index
    %24 = vector.load %arg2[%c1, %c0_21, %c0_22] : memref<2x8x64xf32, #tpu.memory_space<vmem>>, vector<1x8x64xf32>
    %25 = vector.shape_cast %24 : vector<1x8x64xf32> to vector<8x64xf32>
    %cst_23 = arith.constant 0.000000e+00 : f32
    %26 = vector.broadcast %cst_23 : f32 to vector<8x64xf32>
    %27 = arith.maximumf %25, %26 : vector<8x64xf32>
    %c1_24 = arith.constant 1 : index
    %c0_25 = arith.constant 0 : index
    %c0_26 = arith.constant 0 : index
    %28 = vector.load %arg3[%c1_24, %c0_25, %c0_26] : memref<2x8x64xf32, #tpu.memory_space<vmem>>, vector<1x8x64xf32>
    %29 = vector.shape_cast %28 : vector<1x8x64xf32> to vector<8x64xf32>
    %cst_27 = arith.constant 0.000000e+00 : f32
    %30 = vector.broadcast %cst_27 : f32 to vector<8x64xf32>
    %31 = arith.maximumf %29, %30 : vector<8x64xf32>
    %c0_28 = arith.constant 0 : index
    %c0_29 = arith.constant 0 : index
    %32 = vector.load %arg4[%c0_28, %c0_29] : memref<8x8xf32, #tpu.memory_space<vmem>>, vector<8x8xf32>
    %cst_30 = arith.constant dense<0.000000e+00> : vector<8x64xf32>
    %33 = tpu.matmul %32, %27, %cst_30 {dimension_numbers = #tpu.dot_dimension_numbers<[1], [0], [0], [1], [0, 0, 1, 1], [], []>} : vector<8x8xf32>, vector<8x64xf32>, vector<8x64xf32> -> vector<8x64xf32>
    %c0_31 = arith.constant 0 : index
    %c0_32 = arith.constant 0 : index
    %34 = vector.load %arg6[%c0_31, %c0_32] : memref<8x1xf32, #tpu.memory_space<vmem>>, vector<8x1xf32>
    %35 = vector.broadcast %34 : vector<8x1xf32> to vector<8x64xf32>
    %36 = arith.addf %33, %35 : vector<8x64xf32>
    %c0_33 = arith.constant 0 : index
    %c0_34 = arith.constant 0 : index
    %37 = vector.load %arg5[%c0_33, %c0_34] : memref<8x8xf32, #tpu.memory_space<vmem>>, vector<8x8xf32>
    %cst_35 = arith.constant dense<0.000000e+00> : vector<8x64xf32>
    %38 = tpu.matmul %37, %31, %cst_35 {dimension_numbers = #tpu.dot_dimension_numbers<[1], [0], [0], [1], [0, 0, 1, 1], [], []>} : vector<8x8xf32>, vector<8x64xf32>, vector<8x64xf32> -> vector<8x64xf32>
    %c0_36 = arith.constant 0 : index
    %c0_37 = arith.constant 0 : index
    %39 = vector.load %arg7[%c0_36, %c0_37] : memref<8x1xf32, #tpu.memory_space<vmem>>, vector<8x1xf32>
    %40 = vector.broadcast %39 : vector<8x1xf32> to vector<8x64xf32>
    %41 = arith.addf %38, %40 : vector<8x64xf32>
    %c1_38 = arith.constant 1 : index
    %c0_39 = arith.constant 0 : index
    %c0_40 = arith.constant 0 : index
    %42 = vector.load %arg8[%c1_38, %c0_39, %c0_40] : memref<2x16x64xf32, #tpu.memory_space<vmem>>, vector<1x8x64xf32>
    %43 = vector.shape_cast %42 : vector<1x8x64xf32> to vector<8x64xf32>
    %44 = vector.shape_cast %36 : vector<8x64xf32> to vector<1x8x64xf32>
    tpu.vector_store %arg8[%c1_38, %c0_39, %c0_40], %44 {strides = array<i32>} : memref<2x16x64xf32, #tpu.memory_space<vmem>>, vector<1x8x64xf32>,
    %c1_41 = arith.constant 1 : index
    %c8_42 = arith.constant 8 : index
    %c0_43 = arith.constant 0 : index
    %45 = vector.load %arg8[%c1_41, %c8_42, %c0_43] : memref<2x16x64xf32, #tpu.memory_space<vmem>>, vector<1x8x64xf32>
    %46 = vector.shape_cast %45 : vector<1x8x64xf32> to vector<8x64xf32>
    %47 = vector.shape_cast %41 : vector<8x64xf32> to vector<1x8x64xf32>
    tpu.vector_store %arg8[%c1_41, %c8_42, %c0_43], %47 {strides = array<i32>} : memref<2x16x64xf32, #tpu.memory_space<vmem>>, vector<1x8x64xf32>,
    return
  }
  func.func @transform_0(%arg0: i32, %arg1: i32) -> (i32, i32, i32) {
    %c0_i32 = arith.constant 0 : i32
    %c0_i32_0 = arith.constant 0 : i32
    return %arg0, %c0_i32, %arg1 : i32, i32, i32
  }
  func.func @transform_1(%arg0: i32, %arg1: i32) -> (i32, i32, i32) {
    %c0_i32 = arith.constant 0 : i32
    %c0_i32_0 = arith.constant 0 : i32
    return %arg0, %c0_i32, %arg1 : i32, i32, i32
  }
  func.func @transform_2(%arg0: i32, %arg1: i32) -> (i32, i32) {
    %c0_i32 = arith.constant 0 : i32
    %c0_i32_0 = arith.constant 0 : i32
    %c0_i32_1 = arith.constant 0 : i32
    return %c0_i32, %c0_i32_0 : i32, i32
  }
  func.func @transform_3(%arg0: i32, %arg1: i32) -> (i32, i32) {
    %c0_i32 = arith.constant 0 : i32
    %c0_i32_0 = arith.constant 0 : i32
    %c0_i32_1 = arith.constant 0 : i32
    return %c0_i32, %c0_i32_0 : i32, i32
  }
  func.func @transform_4(%arg0: i32, %arg1: i32) -> (i32, i32) {
    %c0_i32 = arith.constant 0 : i32
    %c0_i32_0 = arith.constant 0 : i32
    %c0_i32_1 = arith.constant 0 : i32
    return %c0_i32, %c0_i32_0 : i32, i32
  }
  func.func @transform_5(%arg0: i32, %arg1: i32) -> (i32, i32) {
    %c0_i32 = arith.constant 0 : i32
    %c0_i32_0 = arith.constant 0 : i32
    %c0_i32_1 = arith.constant 0 : i32
    return %c0_i32, %c0_i32_0 : i32, i32
  }
  func.func @transform_6(%arg0: i32, %arg1: i32) -> (i32, i32, i32) {
    %c0_i32 = arith.constant 0 : i32
    %c0_i32_0 = arith.constant 0 : i32
    return %arg0, %c0_i32, %arg1 : i32, i32, i32
  }
}

</mosaic_0001>

<llo_original>
// kernel: tpu_custom_call.1
$region0: #{tpu_custom_call.1}
  #allocation0 [shape = 'u32[]', space=smem, size = 0x4, offset = 0x4, fixed_abs, tag = 'smem constant byte address 0x4 - core index']
  #allocation1 [shape = 'u32[72,128]{1,0:T(1,128)}', space=vmem, size = 0x9000, scoped, tag = 'internal scratch']
  %s0 = inlined_call_operand.vmem [shape: f32[2,8,64], index: 0, kind: input, shape index: {}]
  %s1 = inlined_call_operand.hbm [shape: f32[2,8,64], index: 1, kind: input, shape index: {}]
  %s2 = inlined_call_operand.hbm [shape: f32[8,8], index: 2, kind: input, shape index: {}]
  %s3 = inlined_call_operand.hbm [shape: f32[8,8], index: 3, kind: input, shape index: {}]
  %s4 = inlined_call_operand.vmem [shape: f32[8,1], index: 4, kind: input, shape index: {}]
  %s5 = inlined_call_operand.vmem [shape: f32[8,1], index: 5, kind: input, shape index: {}]
  %s6 = inlined_call_operand.hbm [shape: f32[2,16,64], index: 6, kind: output, shape index: {}]
  %s7 = sld [smem:[#allocation0]]
  $region46: #{tpu_custom_call.1} parent=0
    _
  %s9 = ssub.s32 1, %s7
  %s10 = scalar_select 0, %s9, %s7
  $region1: #{tpu_custom_call.1} parent=0
    #allocation2 [shape = 'u8[8192]{0}', space=vmem, size = 0x2000, scoped, tag = 'input window, operand 1, single buffered']
    #allocation3 [shape = 's32[1]{0}', space=sflag, size = 0x4, scoped, tag = 'scoped memory for tpu_custom_call.1']
    #allocation4 [shape = 's32[1]{0}', space=sflag, size = 0x4, scoped, tag = 'scoped memory for tpu_custom_call.1']
    #allocation5 [shape = 'u8[4096]{0}', space=vmem, size = 0x1000, scoped, tag = 'input window, operand 2, single buffered']
    #allocation6 [shape = 's32[1]{0}', space=sflag, size = 0x4, scoped, tag = 'scoped memory for tpu_custom_call.1']
    #allocation7 [shape = 'u8[4096]{0}', space=vmem, size = 0x1000, scoped, tag = 'input window, operand 3, single buffered']
    #allocation8 [shape = 'u8[16384]{0}', space=vmem, size = 0x4000, scoped, tag = 'output window, operand 0, single buffered']
    %11 = vsyncpa [#allocation3], 0
    %12 = vsyncpa [#allocation6], 0
    %13 = vsyncpa [#allocation4], 0
    // Predicated region
    $region2: #{tpu_custom_call.1} parent=1 // pred_check
      _
    $region3: #{tpu_custom_call.1} parent=1 // pred_check_branch
      %15 = sbr.rel (0) target = $region5
    $region4: #{tpu_custom_call.1} parent=1 // pred_region
      _
    $region5: #{tpu_custom_call.1} parent=1 // pred_fallthru
      _
    // Predicated region
    $region6: #{tpu_custom_call.1} parent=1 // pred_check
      _
    $region7: #{tpu_custom_call.1} parent=1 // pred_check_branch
      %17 = sbr.rel (0) target = $region9
    $region8: #{tpu_custom_call.1} parent=1 // pred_region
      %19 = vsyncadd [#allocation3], 0
      %s20 = sshll.u32 %s1, 4
      %s21 = int_to_ptr.hbm [resolvable:$true] %s20
      %s22 = sshll.u32 [#allocation2], 4
      %s23 = int_to_ptr.vmem [resolvable:$true] %s22
      %28 = dma.hbm_to_vmem [thread:$0]  %s21, 256, %s23, [#allocation3], 128, 128, 8
    $region9: #{tpu_custom_call.1} parent=1 // pred_fallthru
      _
    // Predicated region
    $region10: #{tpu_custom_call.1} parent=1 // pred_check
      _
    $region11: #{tpu_custom_call.1} parent=1 // pred_check_branch
      %30 = sbr.rel (0) target = $region13
    $region12: #{tpu_custom_call.1} parent=1 // pred_region
      %32 = vsyncadd [#allocation6], 0
      %s34 = sshll.u32 %s2, 4
      %s35 = int_to_ptr.hbm [resolvable:$true] %s34
      %s36 = sshll.u32 [#allocation5], 4
      %s37 = int_to_ptr.vmem [resolvable:$true] %s36
      %39 = dma.hbm_to_vmem [thread:$0]  %s35, 128, %s37, [#allocation6]
    $region13: #{tpu_custom_call.1} parent=1 // pred_fallthru
      _
    // Predicated region
    $region14: #{tpu_custom_call.1} parent=1 // pred_check
      _
    $region15: #{tpu_custom_call.1} parent=1 // pred_check_branch
      %41 = sbr.rel (0) target = $region17
    $region16: #{tpu_custom_call.1} parent=1 // pred_region
      %43 = vsyncadd [#allocation6], 0
      %s45 = sshll.u32 %s3, 4
      %s46 = int_to_ptr.hbm [resolvable:$true] %s45
      %s47 = sshll.u32 [#allocation7], 4
      %s48 = int_to_ptr.vmem [resolvable:$true] %s47
      %50 = dma.hbm_to_vmem [thread:$0]  %s46, 128, %s48, [#allocation6]
    $region17: #{tpu_custom_call.1} parent=1 // pred_fallthru
      _
    // Predicated region
    $region18: #{tpu_custom_call.1} parent=1 // pred_check
      _
    $region19: #{tpu_custom_call.1} parent=1 // pred_check_branch
      %52 = sbr.rel (0) target = $region21
    $region20: #{tpu_custom_call.1} parent=1 // pred_region
      _
    $region21: #{tpu_custom_call.1} parent=1 // pred_fallthru
      _
    // Predicated region
    $region22: #{tpu_custom_call.1} parent=1 // pred_check
      _
    $region23: #{tpu_custom_call.1} parent=1 // pred_check_branch
      %54 = sbr.rel (0) target = $region25
    $region24: #{tpu_custom_call.1} parent=1 // pred_region
      _
    $region25: #{tpu_custom_call.1} parent=1 // pred_fallthru
      _
    // Predicated region
    $region26: #{tpu_custom_call.1} parent=1 // pred_check
      _
    $region27: #{tpu_custom_call.1} parent=1 // pred_check_branch
      %56 = sbr.rel (0) target = $region29
    $region28: #{tpu_custom_call.1} parent=1 // pred_region
      %58 = dma.done [#allocation3], 256
    $region29: #{tpu_custom_call.1} parent=1 // pred_fallthru
      _
    // Predicated region
    $region30: #{tpu_custom_call.1} parent=1 // pred_check
      _
    $region31: #{tpu_custom_call.1} parent=1 // pred_check_branch
      %60 = sbr.rel (0) target = $region33
    $region32: #{tpu_custom_call.1} parent=1 // pred_region
      %62 = dma.done [#allocation6], 128
    $region33: #{tpu_custom_call.1} parent=1 // pred_fallthru
      _
    // Predicated region
    $region34: #{tpu_custom_call.1} parent=1 // pred_check
      _
    $region35: #{tpu_custom_call.1} parent=1 // pred_check_branch
      %64 = sbr.rel (0) target = $region37
    $region36: #{tpu_custom_call.1} parent=1 // pred_region
      %66 = dma.done [#allocation6], 128
    $region37: #{tpu_custom_call.1} parent=1 // pred_fallthru
      _
    %v67 = vld [vmem:[%s0] sm:$0xff]
    %v68 = vmax.f32 %v67, 0.0
    %v69 = vld [vmem:[#allocation2] sm:$0xff]
    %v70 = vmax.f32 %v69, 0.0
    %v71 = vld [vmem:[#allocation5] sm:$0xff]
    %v72 = vld [vmem:[%s4] sm:$0xff]
    %74 = vset.pattern.permute.xlu0 0
    %75 = vperm.xlu0 %74, %v72
    %v76 = vpop.permute.xlu0 %75
    %vm78 = vcmask 64512
    %v80 = vsel %vm78, %v71, 0
    %82 = vmatpush.msra.mxu0 0.0
    %83 = vmatpush.msra.mxu0 0.0
    %84 = vmatpush.msra.mxu0 0.0
    %85 = vmatpush.msra.mxu0 0.0
    %86 = vmatpush.msra.mxu0 0.0
    %87 = vmatpush.msra.mxu0 0.0
    %88 = vmatpush.msra.mxu0 0.0
    %89 = vmatpush.msra.mxu0 0.0
    %90 = vmatpush.msra.mxu0 0.0
    %91 = vmatpush.msra.mxu0 0.0
    %92 = vmatpush.msra.mxu0 0.0
    %93 = vmatpush.msra.mxu0 0.0
    %94 = vmatpush.msra.mxu0 0.0
    %95 = vmatpush.msra.mxu0 0.0
    %96 = vmatpush.msra.mxu0 0.0
    %97 = vmatpush.msra.mxu0 %v68
    %98 = vmatmul.f32.gmra.mxu0 %v80
    %v99 = vpop.f32.mrf.mxu0
    %v100 = vadd.f32 %v76, %v99
    %101 = vdwg.mxu0
    %v102 = vld [vmem:[#allocation7] sm:$0xff]
    %v103 = vld [vmem:[%s5] sm:$0xff]
    %105 = vset.pattern.permute.xlu0 0
    %106 = vperm.xlu0 %105, %v103
    %v107 = vpop.permute.xlu0 %106
    %v110 = vsel %vm78, %v102, 0
    %112 = vmatpush.msra.mxu0 0.0
    %113 = vmatpush.msra.mxu0 0.0
    %114 = vmatpush.msra.mxu0 0.0
    %115 = vmatpush.msra.mxu0 0.0
    %116 = vmatpush.msra.mxu0 0.0
    %117 = vmatpush.msra.mxu0 0.0
    %118 = vmatpush.msra.mxu0 0.0
    %119 = vmatpush.msra.mxu0 0.0
    %120 = vmatpush.msra.mxu0 0.0
    %121 = vmatpush.msra.mxu0 0.0
    %122 = vmatpush.msra.mxu0 0.0
    %123 = vmatpush.msra.mxu0 0.0
    %124 = vmatpush.msra.mxu0 0.0
    %125 = vmatpush.msra.mxu0 0.0
    %126 = vmatpush.msra.mxu0 0.0
    %127 = vmatpush.msra.mxu0 %v70
    %128 = vmatmul.f32.gmra.mxu0 %v110
    %v129 = vpop.f32.mrf.mxu0
    %v130 = vadd.f32 %v107, %v129
    %131 = vdwg.mxu0
    %vm132 = vcmask 523264
    %133 = vst.msk [vmem:[#allocation8] sm:$0xff] %vm132, %v100
    %134 = vst.msk [vmem:[#allocation8 + $0x8] sm:$0xff] %vm132, %v130
    %s135 = scalar_lea.vmem %s0, 8
    %v136 = vld [vmem:[%s135] sm:$0xff]
    %v137 = vmax.f32 %v136, 0.0
    %s138 = scalar_lea.vmem [#allocation2], 8
    %v139 = vld [vmem:[%s138] sm:$0xff]
    %v140 = vmax.f32 %v139, 0.0
    %v141 = vld [vmem:[#allocation5] sm:$0xff]
    %v142 = vld [vmem:[%s4] sm:$0xff]
    %144 = vset.pattern.permute.xlu0 0
    %145 = vperm.xlu0 %144, %v142
    %v146 = vpop.permute.xlu0 %145
    %v149 = vsel %vm78, %v141, 0
    %151 = vmatpush.msra.mxu0 0.0
    %152 = vmatpush.msra.mxu0 0.0
    %153 = vmatpush.msra.mxu0 0.0
    %154 = vmatpush.msra.mxu0 0.0
    %155 = vmatpush.msra.mxu0 0.0
    %156 = vmatpush.msra.mxu0 0.0
    %157 = vmatpush.msra.mxu0 0.0
    %158 = vmatpush.msra.mxu0 0.0
    %159 = vmatpush.msra.mxu0 0.0
    %160 = vmatpush.msra.mxu0 0.0
    %161 = vmatpush.msra.mxu0 0.0
    %162 = vmatpush.msra.mxu0 0.0
    %163 = vmatpush.msra.mxu0 0.0
    %164 = vmatpush.msra.mxu0 0.0
    %165 = vmatpush.msra.mxu0 0.0
    %166 = vmatpush.msra.mxu0 %v137
    %167 = vmatmul.f32.gmra.mxu0 %v149
    %v168 = vpop.f32.mrf.mxu0
    %v169 = vadd.f32 %v146, %v168
    %170 = vdwg.mxu0
    %v171 = vld [vmem:[#allocation7] sm:$0xff]
    %v172 = vld [vmem:[%s5] sm:$0xff]
    %174 = vset.pattern.permute.xlu0 0
    %175 = vperm.xlu0 %174, %v172
    %v176 = vpop.permute.xlu0 %175
    %v179 = vsel %vm78, %v171, 0
    %181 = vmatpush.msra.mxu0 0.0
    %182 = vmatpush.msra.mxu0 0.0
    %183 = vmatpush.msra.mxu0 0.0
    %184 = vmatpush.msra.mxu0 0.0
    %185 = vmatpush.msra.mxu0 0.0
    %186 = vmatpush.msra.mxu0 0.0
    %187 = vmatpush.msra.mxu0 0.0
    %188 = vmatpush.msra.mxu0 0.0
    %189 = vmatpush.msra.mxu0 0.0
    %190 = vmatpush.msra.mxu0 0.0
    %191 = vmatpush.msra.mxu0 0.0
    %192 = vmatpush.msra.mxu0 0.0
    %193 = vmatpush.msra.mxu0 0.0
    %194 = vmatpush.msra.mxu0 0.0
    %195 = vmatpush.msra.mxu0 0.0
    %196 = vmatpush.msra.mxu0 %v140
    %197 = vmatmul.f32.gmra.mxu0 %v179
    %v198 = vpop.f32.mrf.mxu0
    %v199 = vadd.f32 %v176, %v198
    %200 = vdwg.mxu0
    %s201 = scalar_lea.vmem [#allocation8], 16
    %202 = vst.msk [vmem:[%s201] sm:$0xff] %vm132, %v169
    %203 = vst.msk [vmem:[%s201 + $0x8] sm:$0xff] %vm132, %v199
    // Predicated region
    $region38: #{tpu_custom_call.1} parent=1 // pred_check
      _
    $region39: #{tpu_custom_call.1} parent=1 // pred_check_branch
      %205 = sbr.rel (0) target = $region41
    $region40: #{tpu_custom_call.1} parent=1 // pred_region
      %207 = vsyncadd [#allocation4], 0
      %s208 = sshll.u32 [#allocation8], 4
      %s209 = int_to_ptr.vmem [resolvable:$true] %s208
      %s210 = sshll.u32 %s6, 4
      %s211 = int_to_ptr.hbm [resolvable:$true] %s210
      %216 = dma.vmem_to_hbm [thread:$0]  %s209, 512, %s211, [#allocation4], 128, 128, 8
    $region41: #{tpu_custom_call.1} parent=1 // pred_fallthru
      _
    // Predicated region
    $region42: #{tpu_custom_call.1} parent=1 // pred_check
      _
    $region43: #{tpu_custom_call.1} parent=1 // pred_check_branch
      %218 = sbr.rel (0) target = $region45
    $region44: #{tpu_custom_call.1} parent=1 // pred_region
      %220 = dma.done [#allocation4], 512
    $region45: #{tpu_custom_call.1} parent=1 // pred_fallthru
      _
    %221 = vsyncpa [#allocation3], 1
    %222 = vsyncpa [#allocation6], 1
    %223 = vsyncpa [#allocation4], 1

</llo_original>
